<compile_context>
chip_gen: v5e
topology: v5e:2x2
jax: 0.10.0
libtpu: 0.0.40
codegen_flags: <defaults>
</compile_context>

<pallas_src>
import jax
import jax.numpy as jnp
from jax.experimental import pallas as pl
from jax.experimental.pallas import tpu as pltpu


def _fused_interleave_kernel(x_ref, w_ref, off_ref, out_ref):
    """x_ref: (C_in, TL); w_ref: (2*TCo, C_in); off_ref: (TCo, 1); out_ref: (TCo, 2*TL)."""
    tco = out_ref.shape[0]
    tl = x_ref.shape[1]
    # One MXU matmul covers both taps: rows [0:TCo] -> even positions, [TCo:2*TCo] -> odd.
    y = jnp.dot(w_ref[...], x_ref[...], preferred_element_type=jnp.float32)   # (2*TCo, TL)
    off = off_ref[...]                                                         # (TCo, 1)
    even = jnp.maximum(y[:tco, :] + off, 0.0)
    odd = jnp.maximum(y[tco:, :] + off, 0.0)
    # In-VMEM lane interleave: out[:, 2*l] = even[:, l], out[:, 2*l + 1] = odd[:, l].
    inter = jnp.stack([even, odd], axis=-1).reshape(tco, 2 * tl)
    out_ref[...] = inter.astype(out_ref.dtype)


def _fused_split_kernel(x_ref, w_ref, off_ref, even_ref, odd_ref):
    """Fallback: identical math, even/odd written separately; interleave happens in XLA."""
    tco = even_ref.shape[0]
    y = jnp.dot(w_ref[...], x_ref[...], preferred_element_type=jnp.float32)   # (2*TCo, TL)
    off = off_ref[...]
    even_ref[...] = jnp.maximum(y[:tco, :] + off, 0.0).astype(even_ref.dtype)
    odd_ref[...] = jnp.maximum(y[tco:, :] + off, 0.0).astype(odd_ref.dtype)


def _pick_tile(total, candidates):
    for c in candidates:
        if total % c == 0:
            return c
    return total


_INKERNEL_INTERLEAVE_OK = None   # None: untested; True/False after the first attempt.


def upsample1d_block(x, weight, bias, gamma, beta, running_mean, running_var, *, eps=1e-5):
    """Forward of Upsample1DBlock on TPU via Pallas.

    x      : (N, C_in, L)  float32 or bfloat16
    weight : (C_in, C_out, 2)   -- PyTorch ConvTranspose1d weight layout
    bias, gamma, beta, running_mean, running_var : (C_out,)
    returns: (N, C_out, 2*L) in x.dtype
    """
    n, c_in, l = x.shape
    c_out = weight.shape[1]
    out_dtype = x.dtype

    # Fold BatchNorm (inference) + conv bias into per-channel scale/offset; push the scale
    # straight into the tiny transposed-conv weights.
    inv_std = jax.lax.rsqrt(running_var.astype(jnp.float32) + eps)
    scale = gamma.astype(jnp.float32) * inv_std                                   # (C_out,)
    offset = beta.astype(jnp.float32) + (bias.astype(jnp.float32)
                                         - running_mean.astype(jnp.float32)) * scale
    w0 = weight[:, :, 0].astype(jnp.float32).T * scale[:, None]                   # (C_out, C_in)
    w1 = weight[:, :, 1].astype(jnp.float32).T * scale[:, None]

    # Tiling: TL a multiple of 128 (or full, small L) so both the x tile (TL lanes) and the
    # output tile (2*TL lanes) are lane-dense; TCo a multiple of 8 (or full C_out).  Caps keep
    # double-buffered blocks well inside the 64 MiB v7x VMEM (they also fit v5e/v6e).
    tl = _pick_tile(l, (512, 256, 128))
    tco = _pick_tile(c_out, (256, 128, 64, 32, 16, 8))
    nl, nco = l // tl, c_out // tco
    grid = (n, nl, nco)          # channel axis innermost -> x tile stays resident across it

    # Per-channel-block weights with both taps stacked along the M axis (single MXU call).
    mxu_dtype = jnp.bfloat16 if out_dtype == jnp.bfloat16 else jnp.float32
    w_cat = jnp.concatenate([w0.reshape(nco, tco, c_in),
                             w1.reshape(nco, tco, c_in)], axis=1).astype(mxu_dtype)
    off2d = offset.reshape(c_out, 1)                                              # f32

    in_specs = [
        # x: batch dim squeezed -> kernel sees (C_in, TL); block index constant over ci.
        pl.BlockSpec((None, c_in, tl), lambda b, li, ci: (b, 0, li)),
        # weights / offsets: tiny, one small DMA per channel block.
        pl.BlockSpec((None, 2 * tco, c_in), lambda b, li, ci: (ci, 0, 0)),
        pl.BlockSpec((tco, 1), lambda b, li, ci: (ci, 0)),
    ]
    compiler_params = pltpu.CompilerParams(
        # batch/length parallel (megacore split), channel "arbitrary" so the resident x tile
        # is not re-fetched per core across the inner axis.
        dimension_semantics=("parallel", "parallel", "arbitrary"),
        vmem_limit_bytes=48 * 1024 * 1024,
    )
    out_bytes = n * c_out * 2 * l * jnp.dtype(out_dtype).itemsize
    bytes_accessed = (x.size * x.dtype.itemsize + out_bytes
                      + w_cat.size * w_cat.dtype.itemsize + off2d.size * 4)
    cost = pl.CostEstimate(flops=4 * n * c_in * c_out * l, transcendentals=0,
                           bytes_accessed=bytes_accessed)

    def call_interleaved():
        return pl.pallas_call(
            _fused_interleave_kernel,
            out_shape=jax.ShapeDtypeStruct((n, c_out, 2 * l), out_dtype),
            grid_spec=pltpu.PrefetchScalarGridSpec(
                num_scalar_prefetch=0,
                grid=grid,
                in_specs=in_specs,
                out_specs=pl.BlockSpec((None, tco, 2 * tl), lambda b, li, ci: (b, ci, li)),
            ),
            compiler_params=compiler_params,
            cost_estimate=cost,
        )(x, w_cat, off2d)

    def call_split():
        even, odd = pl.pallas_call(
            _fused_split_kernel,
            out_shape=(jax.ShapeDtypeStruct((n, c_out, l), out_dtype),
                       jax.ShapeDtypeStruct((n, c_out, l), out_dtype)),
            grid_spec=pltpu.PrefetchScalarGridSpec(
                num_scalar_prefetch=0,
                grid=grid,
                in_specs=in_specs,
                out_specs=[pl.BlockSpec((None, tco, tl), lambda b, li, ci: (b, ci, li)),
                           pl.BlockSpec((None, tco, tl), lambda b, li, ci: (b, ci, li))],
            ),
            compiler_params=compiler_params,
            cost_estimate=cost,
        )(x, w_cat, off2d)
        # TODO(synk): this fallback pays one extra XLA pass over the output for the interleave.
        return jnp.stack([even, odd], axis=-1).reshape(n, c_out, 2 * l)

    global _INKERNEL_INTERLEAVE_OK
    if _INKERNEL_INTERLEAVE_OK is None:
        try:
            out = jax.block_until_ready(call_interleaved())
            _INKERNEL_INTERLEAVE_OK = True
            return out
        except Exception:
            # In-kernel lane interleave (stack+reshape on the VMEM tile) did not lower on this
            # Mosaic version; use the two-output + XLA-interleave path instead.
            _INKERNEL_INTERLEAVE_OK = False
            return call_split()
    return call_interleaved() if _INKERNEL_INTERLEAVE_OK else call_split()


def _reference_upsample1d_block(x, weight, bias, gamma, beta, mean, var, eps=1e-5):
    """Pure-JAX reference: ConvTranspose1d(k=2, s=2) + BatchNorm1d (eval) + ReLU."""
    y = jnp.einsum("ncl,cok->nolk", x.astype(jnp.float32), weight.astype(jnp.float32))
    n, co, l, _ = y.shape
    y = y.reshape(n, co, 2 * l) + bias[None, :, None]
    y = (y - mean[None, :, None]) * jax.lax.rsqrt(var[None, :, None] + eps)
    y = y * gamma[None, :, None] + beta[None, :, None]
    return jnp.maximum(y, 0.0)


if __name__ == "__main__":
    key = jax.random.PRNGKey(0)
    k_x, k_w, k_b, k_g, k_be, k_m, k_v = jax.random.split(key, 7)

    # Small shapes consistent with the module: batch=2, in/out channels=4, seq=16.
    N, C_IN, C_OUT, L = 2, 4, 4, 16

    x = jax.random.normal(k_x, (N, C_IN, L), dtype=jnp.float32)
    weight = jax.random.normal(k_w, (C_IN, C_OUT, 2), dtype=jnp.float32) * 0.5
    bias = jax.random.normal(k_b, (C_OUT,), dtype=jnp.float32) * 0.1
    gamma = 1.0 + 0.1 * jax.random.normal(k_g, (C_OUT,), dtype=jnp.float32)
    beta = 0.1 * jax.random.normal(k_be, (C_OUT,), dtype=jnp.float32)
    running_mean = 0.1 * jax.random.normal(k_m, (C_OUT,), dtype=jnp.float32)
    running_var = jax.random.uniform(k_v, (C_OUT,), dtype=jnp.float32, minval=0.5, maxval=1.5)

    out = upsample1d_block(x, weight, bias, gamma, beta, running_mean, running_var)
    out = jax.block_until_ready(out)

    ref = _reference_upsample1d_block(x, weight, bias, gamma, beta, running_mean, running_var)
    assert out.shape == (N, C_OUT, 2 * L), out.shape
    assert jnp.allclose(out, ref, atol=1e-4, rtol=1e-4), float(jnp.max(jnp.abs(out - ref)))

    print("KERNEL_OK")
</pallas_src>

<mosaic_0001>
module attributes {stable_mosaic.version = 11 : i64} {
  func.func @_fused_interleave_kernel(%arg0: i32, %arg1: i32, %arg2: i32, %arg3: memref<1x4x16xf32, #tpu.memory_space<vmem>>, %arg4: memref<1x8x4xf32, #tpu.memory_space<vmem>>, %arg5: memref<4x1xf32, #tpu.memory_space<vmem>>, %arg6: memref<1x4x32xf32, #tpu.memory_space<vmem>>) attributes {dimension_semantics = [#tpu.dimension_semantics<parallel>, #tpu.dimension_semantics<parallel>, #tpu.dimension_semantics<arbitrary>], iteration_bounds = array<i64: 2, 1, 1>, scalar_prefetch = 0 : i64, scratch_operands = 0 : i64, tpu.core_type = #tpu.core_type<tc>, window_params = [{transform_indices = @transform_0, window_bounds = array<i64: 1, 4, 16>}, {transform_indices = @transform_1, window_bounds = array<i64: 1, 8, 4>}, {transform_indices = @transform_2, window_bounds = array<i64: 4, 1>}, {transform_indices = @transform_3, window_bounds = array<i64: 1, 4, 32>}]} {
    %c0 = arith.constant 0 : index
    %c0_0 = arith.constant 0 : index
    %c0_1 = arith.constant 0 : index
    %0 = vector.load %arg4[%c0, %c0_0, %c0_1] : memref<1x8x4xf32, #tpu.memory_space<vmem>>, vector<1x8x4xf32>
    %1 = vector.shape_cast %0 : vector<1x8x4xf32> to vector<8x4xf32>
    %c0_2 = arith.constant 0 : index
    %c0_3 = arith.constant 0 : index
    %c0_4 = arith.constant 0 : index
    %2 = vector.load %arg3[%c0_2, %c0_3, %c0_4] : memref<1x4x16xf32, #tpu.memory_space<vmem>>, vector<1x4x16xf32>
    %3 = vector.shape_cast %2 : vector<1x4x16xf32> to vector<4x16xf32>
    %cst = arith.constant dense<0.000000e+00> : vector<8x16xf32>
    %4 = tpu.matmul %1, %3, %cst {dimension_numbers = #tpu.dot_dimension_numbers<[1], [0], [0], [1], [0, 0, 1, 1], [], []>} : vector<8x4xf32>, vector<4x16xf32>, vector<8x16xf32> -> vector<8x16xf32>
    %c0_5 = arith.constant 0 : index
    %c0_6 = arith.constant 0 : index
    %5 = vector.load %arg5[%c0_5, %c0_6] : memref<4x1xf32, #tpu.memory_space<vmem>>, vector<4x1xf32>
    %6 = vector.extract_strided_slice %4 {offsets = [0, 0], sizes = [4, 16], strides = [1, 1]} : vector<8x16xf32> to vector<4x16xf32>
    %7 = vector.broadcast %5 : vector<4x1xf32> to vector<4x16xf32>
    %8 = arith.addf %6, %7 : vector<4x16xf32>
    %cst_7 = arith.constant 0.000000e+00 : f32
    %9 = vector.broadcast %cst_7 : f32 to vector<4x16xf32>
    %10 = arith.maximumf %8, %9 : vector<4x16xf32>
    %11 = vector.extract_strided_slice %4 {offsets = [4, 0], sizes = [4, 16], strides = [1, 1]} : vector<8x16xf32> to vector<4x16xf32>
    %12 = vector.broadcast %5 : vector<4x1xf32> to vector<4x16xf32>
    %13 = arith.addf %11, %12 : vector<4x16xf32>
    %cst_8 = arith.constant 0.000000e+00 : f32
    %14 = vector.broadcast %cst_8 : f32 to vector<4x16xf32>
    %15 = arith.maximumf %13, %14 : vector<4x16xf32>
    %16 = vector.shape_cast %10 : vector<4x16xf32> to vector<4x16x1xf32>
    %17 = vector.shape_cast %15 : vector<4x16xf32> to vector<4x16x1xf32>
    %18 = tpu.concatenate %16, %17 in 2 : vector<4x16x1xf32>, vector<4x16x1xf32> -> vector<4x16x2xf32>
    %19 = vector.shape_cast %18 : vector<4x16x2xf32> to vector<4x32xf32>
    %c0_9 = arith.constant 0 : index
    %c0_10 = arith.constant 0 : index
    %c0_11 = arith.constant 0 : index
    %20 = vector.load %arg6[%c0_9, %c0_10, %c0_11] : memref<1x4x32xf32, #tpu.memory_space<vmem>>, vector<1x4x32xf32>
    %21 = vector.shape_cast %20 : vector<1x4x32xf32> to vector<4x32xf32>
    %22 = vector.shape_cast %19 : vector<4x32xf32> to vector<1x4x32xf32>
    tpu.vector_store %arg6[%c0_9, %c0_10, %c0_11], %22 {strides = array<i32>} : memref<1x4x32xf32, #tpu.memory_space<vmem>>, vector<1x4x32xf32>,
    return
  }
  func.func @transform_0(%arg0: i32, %arg1: i32, %arg2: i32) -> (i32, i32, i32) {
    %c0_i32 = arith.constant 0 : i32
    %c0_i32_0 = arith.constant 0 : i32
    return %arg0, %c0_i32, %arg1 : i32, i32, i32
  }
  func.func @transform_1(%arg0: i32, %arg1: i32, %arg2: i32) -> (i32, i32, i32) {
    %c0_i32 = arith.constant 0 : i32
    %c0_i32_0 = arith.constant 0 : i32
    %c0_i32_1 = arith.constant 0 : i32
    return %arg2, %c0_i32, %c0_i32_0 : i32, i32, i32
  }
  func.func @transform_2(%arg0: i32, %arg1: i32, %arg2: i32) -> (i32, i32) {
    %c0_i32 = arith.constant 0 : i32
    %c0_i32_0 = arith.constant 0 : i32
    return %arg2, %c0_i32 : i32, i32
  }
  func.func @transform_3(%arg0: i32, %arg1: i32, %arg2: i32) -> (i32, i32, i32) {
    %c0_i32 = arith.constant 0 : i32
    return %arg0, %arg2, %arg1 : i32, i32, i32
  }
}

module attributes {stable_mosaic.version = 11 : i64} {
  func.func @_fused_split_kernel(%arg0: i32, %arg1: i32, %arg2: i32, %arg3: memref<1x4x16xf32, #tpu.memory_space<vmem>>, %arg4: memref<1x8x4xf32, #tpu.memory_space<vmem>>, %arg5: memref<4x1xf32, #tpu.memory_space<vmem>>, %arg6: memref<1x4x16xf32, #tpu.memory_space<vmem>>, %arg7: memref<1x4x16xf32, #tpu.memory_space<vmem>>) attributes {dimension_semantics = [#tpu.dimension_semantics<parallel>, #tpu.dimension_semantics<parallel>, #tpu.dimension_semantics<arbitrary>], iteration_bounds = array<i64: 2, 1, 1>, scalar_prefetch = 0 : i64, scratch_operands = 0 : i64, tpu.core_type = #tpu.core_type<tc>, window_params = [{transform_indices = @transform_0, window_bounds = array<i64: 1, 4, 16>}, {transform_indices = @transform_1, window_bounds = array<i64: 1, 8, 4>}, {transform_indices = @transform_2, window_bounds = array<i64: 4, 1>}, {transform_indices = @transform_3, window_bounds = array<i64: 1, 4, 16>}, {transform_indices = @transform_4, window_bounds = array<i64: 1, 4, 16>}]} {
    %c0 = arith.constant 0 : index
    %c0_0 = arith.constant 0 : index
    %c0_1 = arith.constant 0 : index
    %0 = vector.load %arg4[%c0, %c0_0, %c0_1] : memref<1x8x4xf32, #tpu.memory_space<vmem>>, vector<1x8x4xf32>
    %1 = vector.shape_cast %0 : vector<1x8x4xf32> to vector<8x4xf32>
    %c0_2 = arith.constant 0 : index
    %c0_3 = arith.constant 0 : index
    %c0_4 = arith.constant 0 : index
    %2 = vector.load %arg3[%c0_2, %c0_3, %c0_4] : memref<1x4x16xf32, #tpu.memory_space<vmem>>, vector<1x4x16xf32>
    %3 = vector.shape_cast %2 : vector<1x4x16xf32> to vector<4x16xf32>
    %cst = arith.constant dense<0.000000e+00> : vector<8x16xf32>
    %4 = tpu.matmul %1, %3, %cst {dimension_numbers = #tpu.dot_dimension_numbers<[1], [0], [0], [1], [0, 0, 1, 1], [], []>} : vector<8x4xf32>, vector<4x16xf32>, vector<8x16xf32> -> vector<8x16xf32>
    %c0_5 = arith.constant 0 : index
    %c0_6 = arith.constant 0 : index
    %5 = vector.load %arg5[%c0_5, %c0_6] : memref<4x1xf32, #tpu.memory_space<vmem>>, vector<4x1xf32>
    %6 = vector.extract_strided_slice %4 {offsets = [0, 0], sizes = [4, 16], strides = [1, 1]} : vector<8x16xf32> to vector<4x16xf32>
    %7 = vector.broadcast %5 : vector<4x1xf32> to vector<4x16xf32>
    %8 = arith.addf %6, %7 : vector<4x16xf32>
    %cst_7 = arith.constant 0.000000e+00 : f32
    %9 = vector.broadcast %cst_7 : f32 to vector<4x16xf32>
    %10 = arith.maximumf %8, %9 : vector<4x16xf32>
    %c0_8 = arith.constant 0 : index
    %c0_9 = arith.constant 0 : index
    %c0_10 = arith.constant 0 : index
    %11 = vector.load %arg6[%c0_8, %c0_9, %c0_10] : memref<1x4x16xf32, #tpu.memory_space<vmem>>, vector<1x4x16xf32>
    %12 = vector.shape_cast %11 : vector<1x4x16xf32> to vector<4x16xf32>
    %13 = vector.shape_cast %10 : vector<4x16xf32> to vector<1x4x16xf32>
    tpu.vector_store %arg6[%c0_8, %c0_9, %c0_10], %13 {strides = array<i32>} : memref<1x4x16xf32, #tpu.memory_space<vmem>>, vector<1x4x16xf32>,
    %14 = vector.extract_strided_slice %4 {offsets = [4, 0], sizes = [4, 16], strides = [1, 1]} : vector<8x16xf32> to vector<4x16xf32>
    %15 = vector.broadcast %5 : vector<4x1xf32> to vector<4x16xf32>
    %16 = arith.addf %14, %15 : vector<4x16xf32>
    %cst_11 = arith.constant 0.000000e+00 : f32
    %17 = vector.broadcast %cst_11 : f32 to vector<4x16xf32>
    %18 = arith.maximumf %16, %17 : vector<4x16xf32>
    %c0_12 = arith.constant 0 : index
    %c0_13 = arith.constant 0 : index
    %c0_14 = arith.constant 0 : index
    %19 = vector.load %arg7[%c0_12, %c0_13, %c0_14] : memref<1x4x16xf32, #tpu.memory_space<vmem>>, vector<1x4x16xf32>
    %20 = vector.shape_cast %19 : vector<1x4x16xf32> to vector<4x16xf32>
    %21 = vector.shape_cast %18 : vector<4x16xf32> to vector<1x4x16xf32>
    tpu.vector_store %arg7[%c0_12, %c0_13, %c0_14], %21 {strides = array<i32>} : memref<1x4x16xf32, #tpu.memory_space<vmem>>, vector<1x4x16xf32>,
    return
  }
  func.func @transform_0(%arg0: i32, %arg1: i32, %arg2: i32) -> (i32, i32, i32) {
    %c0_i32 = arith.constant 0 : i32
    %c0_i32_0 = arith.constant 0 : i32
    return %arg0, %c0_i32, %arg1 : i32, i32, i32
  }
  func.func @transform_1(%arg0: i32, %arg1: i32, %arg2: i32) -> (i32, i32, i32) {
    %c0_i32 = arith.constant 0 : i32
    %c0_i32_0 = arith.constant 0 : i32
    %c0_i32_1 = arith.constant 0 : i32
    return %arg2, %c0_i32, %c0_i32_0 : i32, i32, i32
  }
  func.func @transform_2(%arg0: i32, %arg1: i32, %arg2: i32) -> (i32, i32) {
    %c0_i32 = arith.constant 0 : i32
    %c0_i32_0 = arith.constant 0 : i32
    return %arg2, %c0_i32 : i32, i32
  }
  func.func @transform_3(%arg0: i32, %arg1: i32, %arg2: i32) -> (i32, i32, i32) {
    %c0_i32 = arith.constant 0 : i32
    return %arg0, %arg2, %arg1 : i32, i32, i32
  }
  func.func @transform_4(%arg0: i32, %arg1: i32, %arg2: i32) -> (i32, i32, i32) {
    %c0_i32 = arith.constant 0 : i32
    return %arg0, %arg2, %arg1 : i32, i32, i32
  }
}

</mosaic_0001>

<llo_original>
// kernel: tpu_custom_call.1
$region0: #{tpu_custom_call.1}
  #allocation0 [shape = 'u32[]', space=smem, size = 0x4, offset = 0x4, fixed_abs, tag = 'smem constant byte address 0x4 - core index']
  #allocation1 [shape = 'u32[72,128]{1,0:T(1,128)}', space=vmem, size = 0x9000, scoped, tag = 'internal scratch']
  %s0 = inlined_call_operand.vmem [shape: f32[2,4,16], index: 0, kind: input, shape index: {}]
  %s1 = inlined_call_operand.vmem [shape: f32[1,8,4], index: 1, kind: input, shape index: {}]
  %s2 = inlined_call_operand.vmem [shape: f32[4,1], index: 2, kind: input, shape index: {}]
  %s3 = inlined_call_operand.hbm [shape: f32[2,4,32], index: 3, kind: output, shape index: {}]
  %s4 = sld [smem:[#allocation0]]
  $region45: #{tpu_custom_call.1} parent=0
    _
  %s6 = ssub.s32 1, %s4
  %s7 = scalar_select 0, %s6, %s4
  $region1: #{tpu_custom_call.1} parent=0
    #allocation2 [shape = 'u8[4096]{0}', space=vmem, size = 0x1000, scoped, tag = 'output window, operand 0']
    #allocation3 [shape = 's32[2]{0}', space=sflag, size = 0x8, scoped, tag = 'scoped memory for tpu_custom_call.1']
    %8 = vsyncpa [#allocation3], 0
    %s9 = scalar_lea.sflag [#allocation3], 1
    %10 = vsyncpa %s9, 0
    loop: start=0, step=1, limit=4
    $region2: #{tpu_custom_call.1} parent=1 // loop_pre_header
      _
    $region3: #{tpu_custom_call.1} parent=1 // loop_header
      %s12 = sphi 0, %s16
      %p13 = scmp.ge.s32.totalorder %s12, 4
      %s19 = sphi 0, %s38
      %s20 = sphi 0, %s34
      %s21 = sphi 0, %s30
      %s22 = sphi 0, %s19
      %s23 = sphi 0, %s20
      %s24 = sphi 0, %s21
      %s25 = sphi 0, %s22
      %s26 = sphi 0, %s23
      %s27 = sphi 0, %s24
      %s43 = sphi 0, %s45
      %s46 = sphi 0, %s43
      %s47 = sphi 0, %s46
      %s63 = sphi 0, %s47
      %s69 = sphi 0, %s71
      %s72 = sphi 0, %s69
      %s73 = sphi 0, %s72
      %s89 = sphi 0, %s73
      %s95 = sphi 0, %s97
      %s98 = sphi 0, %s95
      %s99 = sphi 0, %s98
      %s115 = sphi 0, %s99
      %s125 = sphi 0, %s127
      %s128 = sphi 0, %s125
      %s129 = sphi 0, %s128
      %s145 = sphi 0, %s129
    $region4: #{tpu_custom_call.1} parent=1 // loop_header_branch
      %15 = sbr.rel (%p13) target = $region8
    $region5: #{tpu_custom_call.1} parent=1 // loop_body
      %s17 = ssub.s32 %s12, 1
      %s18 = ssub.s32 %s12, 2
      %s28 = sadd.s32 1, %s21
      %p29 = scmp.ge.s32.totalorder %s28, 1
      %s30 = scalar_select %p29, 0, %s28
      %s31 = sadd.s32 1, %s20
      %s32 = scalar_select %p29, %s31, %s20
      %p33 = scmp.ge.s32.totalorder %s32, 1
      %s34 = scalar_select %p33, 0, %s32
      %s35 = sadd.s32 1, %s19
      %s36 = scalar_select %p33, %s35, %s19
      %p37 = scmp.ge.s32.totalorder %s36, 2
      %s38 = scalar_select %p37, 0, %s36
      %s39 = ssub.s32 %s19, %s38
      %s40 = ssub.s32 %s20, %s34
      %s41 = sor.u32 %s39, %s40
      %p42 = scmp.eq.s32.totalorder %s41, 0
      %s44 = sadd.s32 %s43, 1
      %s45 = scalar_select %p42, %s43, %s44
      %p48 = pneg %p42
      %p49 = scmp.eq.s32.totalorder %s12, 1
      %p50 = por %p48, %p49
      %p51 = scmp.ne.s32.totalorder %s43, %s46
      %p52 = scmp.eq.s32.totalorder %s12, 0
      %p53 = por %p51, %p52
      %p54 = scmp.ne.s32.totalorder %s43, %s46
      %p55 = scmp.eq.s32.totalorder %s17, 1
      %p56 = por %p54, %p55
      %p57 = scmp.ne.s32.totalorder %s46, %s47
      %p58 = scmp.eq.s32.totalorder %s17, 0
      %p59 = por %p57, %p58
      %p60 = scmp.ne.s32.totalorder %s46, %s47
      %p61 = scmp.eq.s32.totalorder %s18, 1
      %p62 = por %p60, %p61
      %p64 = scmp.ne.s32.totalorder %s47, %s63
      %p65 = scmp.eq.s32.totalorder %s18, 0
      %p66 = por %p64, %p65
      %s67 = ssub.s32 %s21, %s30
      %p68 = scmp.eq.s32.totalorder %s67, 0
      %s70 = sadd.s32 %s69, 1
      %s71 = scalar_select %p68, %s69, %s70
      %p74 = pneg %p68
      %p75 = scmp.eq.s32.totalorder %s12, 1
      %p76 = por %p74, %p75
      %p77 = scmp.ne.s32.totalorder %s69, %s72
      %p78 = scmp.eq.s32.totalorder %s12, 0
      %p79 = por %p77, %p78
      %p80 = scmp.ne.s32.totalorder %s69, %s72
      %p81 = scmp.eq.s32.totalorder %s17, 1
      %p82 = por %p80, %p81
      %p83 = scmp.ne.s32.totalorder %s72, %s73
      %p84 = scmp.eq.s32.totalorder %s17, 0
      %p85 = por %p83, %p84
      %p86 = scmp.ne.s32.totalorder %s72, %s73
      %p87 = scmp.eq.s32.totalorder %s18, 1
      %p88 = por %p86, %p87
      %p90 = scmp.ne.s32.totalorder %s73, %s89
      %p91 = scmp.eq.s32.totalorder %s18, 0
      %p92 = por %p90, %p91
      %s93 = ssub.s32 %s21, %s30
      %p94 = scmp.eq.s32.totalorder %s93, 0
      %s96 = sadd.s32 %s95, 1
      %s97 = scalar_select %p94, %s95, %s96
      %p100 = pneg %p94
      %p101 = scmp.eq.s32.totalorder %s12, 1
      %p102 = por %p100, %p101
      %p103 = scmp.ne.s32.totalorder %s95, %s98
      %p104 = scmp.eq.s32.totalorder %s12, 0
      %p105 = por %p103, %p104
      %p106 = scmp.ne.s32.totalorder %s95, %s98
      %p107 = scmp.eq.s32.totalorder %s17, 1
      %p108 = por %p106, %p107
      %p109 = scmp.ne.s32.totalorder %s98, %s99
      %p110 = scmp.eq.s32.totalorder %s17, 0
      %p111 = por %p109, %p110
      %p112 = scmp.ne.s32.totalorder %s98, %s99
      %p113 = scmp.eq.s32.totalorder %s18, 1
      %p114 = por %p112, %p113
      %p116 = scmp.ne.s32.totalorder %s99, %s115
      %p117 = scmp.eq.s32.totalorder %s18, 0
      %p118 = por %p116, %p117
      %s119 = ssub.s32 %s19, %s38
      %s120 = ssub.s32 %s21, %s30
      %s121 = sor.u32 %s119, %s120
      %s122 = ssub.s32 %s20, %s34
      %s123 = sor.u32 %s121, %s122
      %p124 = scmp.eq.s32.totalorder %s123, 0
      %s126 = sadd.s32 %s125, 1
      %s127 = scalar_select %p124, %s125, %s126
      %p130 = pneg %p124
      %p131 = scmp.eq.s32.totalorder %s12, 1
      %p132 = por %p130, %p131
      %p133 = scmp.ne.s32.totalorder %s125, %s128
      %p134 = scmp.eq.s32.totalorder %s12, 0
      %p135 = por %p133, %p134
      %p136 = scmp.ne.s32.totalorder %s125, %s128
      %p137 = scmp.eq.s32.totalorder %s17, 1
      %p138 = por %p136, %p137
      %p139 = scmp.ne.s32.totalorder %s128, %s129
      %p140 = scmp.eq.s32.totalorder %s17, 0
      %p141 = por %p139, %p140
      %p142 = scmp.ne.s32.totalorder %s128, %s129
      %p143 = scmp.eq.s32.totalorder %s18, 1
      %p144 = por %p142, %p143
      %p146 = scmp.ne.s32.totalorder %s129, %s145
      %p147 = scmp.eq.s32.totalorder %s18, 0
      %p148 = por %p146, %p147
      %p149 = scmp.le.s32.totalorder 1, %s12
      %p150 = scmp.lt.s32.totalorder %s12, 3
      %p151 = pnand %p149, %p150
      %p152 = pneg %p151
      // Predicated region
      $region9: #{tpu_custom_call.1} parent=5 // pred_check
        _
      $region10: #{tpu_custom_call.1} parent=5 // pred_check_branch
        %154 = sbr.rel (%p151) target = $region12
      $region11: #{tpu_custom_call.1} parent=5 // pred_region
        %s155 = ssub.s32 %s12, 1
        // Predicated region
        $region13: #{tpu_custom_call.1} parent=11 // pred_check
          %p156 = pneg %p85
        $region14: #{tpu_custom_call.1} parent=11 // pred_check_branch
          %158 = sbr.rel (%p156) target = $region16
        $region15: #{tpu_custom_call.1} parent=11 // pred_region
          %p159 = scmp.lt.s32.totalorder %s24, 0
          %s160 = scalar_select %p159, %s24, 0
          %s161 = smul.addr %s160, 8
          %s162 = scalar_lea.vmem %s1, %s161
        $region16: #{tpu_custom_call.1} parent=11 // pred_fallthru
          _
        // Predicated region
        $region17: #{tpu_custom_call.1} parent=11 // pred_check
          %p163 = pneg %p111
        $region18: #{tpu_custom_call.1} parent=11 // pred_check_branch
          %165 = sbr.rel (%p163) target = $region20
        $region19: #{tpu_custom_call.1} parent=11 // pred_region
          %p166 = scmp.lt.s32.totalorder %s24, 0
          %s167 = scalar_select %p166, %s24, 0
          %s168 = smul.addr %s167, 4
          %s169 = scalar_lea.vmem %s2, %s168
        $region20: #{tpu_custom_call.1} parent=11 // pred_fallthru
          _
      $region12: #{tpu_custom_call.1} parent=5 // pred_fallthru
        _
      %p170 = scmp.lt.s32.totalorder %s12, 2
      // Predicated region
      $region21: #{tpu_custom_call.1} parent=5 // pred_check
        %p171 = pneg %p170
      $region22: #{tpu_custom_call.1} parent=5 // pred_check_branch
        %173 = sbr.rel (%p171) target = $region24
      $region23: #{tpu_custom_call.1} parent=5 // pred_region
        // Predicated region
        $region25: #{tpu_custom_call.1} parent=23 // pred_check
          %p174 = pneg %p53
        $region26: #{tpu_custom_call.1} parent=23 // pred_check_branch
          %176 = sbr.rel (%p174) target = $region28
        $region27: #{tpu_custom_call.1} parent=23 // pred_region
          %p177 = scmp.lt.s32.totalorder %s19, 1
          %s178 = scalar_select %p177, %s19, 1
          %p179 = scmp.lt.s32.totalorder %s20, 0
          %s180 = scalar_select %p179, %s20, 0
          %s181 = sadd.s32 %s180, %s178
          %s182 = smul.addr %s181, 4
          %s183 = scalar_lea.vmem %s0, %s182
        $region28: #{tpu_custom_call.1} parent=23 // pred_fallthru
          _
      $region24: #{tpu_custom_call.1} parent=5 // pred_fallthru
        _
      %p184 = scmp.le.s32.totalorder 1, %s12
      %p185 = scmp.lt.s32.totalorder %s12, 3
      %p186 = pnand %p184, %p185
      %p187 = pneg %p186
      // Predicated region
      $region29: #{tpu_custom_call.1} parent=5 // pred_check
        _
      $region30: #{tpu_custom_call.1} parent=5 // pred_check_branch
        %189 = sbr.rel (%p186) target = $region32
      $region31: #{tpu_custom_call.1} parent=5 // pred_region
        %s190 = ssub.s32 %s12, 1
        %p191 = scmp.lt.s32.totalorder %s22, 1
        %s192 = scalar_select %p191, %s22, 1
        %p193 = scmp.lt.s32.totalorder %s23, 0
        %s194 = scalar_select %p193, %s23, 0
        %s195 = sadd.s32 %s194, %s192
        %s196 = smul.addr %s195, 4
        %s197 = scalar_lea.vmem %s0, %s196
        %p198 = pneg %p59
        %p199 = pneg %p56
        %p200 = scmp.lt.s32.totalorder %s24, 0
        %s201 = scalar_select %p200, %s24, 0
        %s202 = smul.addr %s201, 8
        %s203 = scalar_lea.vmem %s1, %s202
        %p204 = pneg %p85
        %p205 = pneg %p82
        %p206 = scmp.lt.s32.totalorder %s24, 0
        %s207 = scalar_select %p206, %s24, 0
        %s208 = smul.addr %s207, 4
        %s209 = scalar_lea.vmem %s2, %s208
        %p210 = pneg %p111
        %p211 = pneg %p108
        %p212 = pneg %p141
        %p213 = pneg %p138
        %s214 = sand.u32 %s128, 1
        %s215 = scalar_lea.sflag [#allocation3], %s214
        %s216 = sand.u32 %s128, 1
        %s217 = smul.addr %s216, 4
        %s218 = scalar_lea.vmem [#allocation2], %s217
        %p219 = scmp.lt.s32.totalorder %s22, 1
        %s220 = scalar_select %p219, %s22, 1
        %p221 = scmp.lt.s32.totalorder %s23, 0
        %s222 = scalar_select %p221, %s23, 0
        %s223 = sadd.s32 %s222, %s220
        %s224 = smul.addr %s223, 4
        %s225 = scalar_lea.vmem %s0, %s224
        %p226 = scmp.lt.s32.totalorder %s24, 0
        %s227 = scalar_select %p226, %s24, 0
        %s228 = smul.addr %s227, 8
        %s229 = scalar_lea.vmem %s1, %s228
        %p230 = scmp.lt.s32.totalorder %s24, 0
        %s231 = scalar_select %p230, %s24, 0
        %s232 = smul.addr %s231, 4
        %s233 = scalar_lea.vmem %s2, %s232
        %v234 = vld [vmem:[%s229] sm:$0xff]
        %v235 = vld [vmem:[%s225] sm:$0xf]
        %vm236 = vcmask 31744
        %v238 = vsel %vm236, %v234, 0
        %vm240 = vcmask 1043456
        %v242 = vsel %vm240, %v235, 0
        %244 = vmatpush.msra.mxu0 0.0
        %245 = vmatpush.msra.mxu0 0.0
        %246 = vmatpush.msra.mxu0 0.0
        %247 = vmatpush.msra.mxu0 0.0
        %248 = vmatpush.msra.mxu0 0.0
        %249 = vmatpush.msra.mxu0 0.0
        %250 = vmatpush.msra.mxu0 0.0
        %251 = vmatpush.msra.mxu0 0.0
        %252 = vmatpush.msra.mxu0 0.0
        %253 = vmatpush.msra.mxu0 0.0
        %254 = vmatpush.msra.mxu0 0.0
        %255 = vmatpush.msra.mxu0 0.0
        %256 = vmatpush.msra.mxu0 0.0
        %257 = vmatpush.msra.mxu0 0.0
        %258 = vmatpush.msra.mxu0 0.0
        %259 = vmatpush.msra.mxu0 %v242
        %260 = vmatmul.f32.gmra.mxu0 %v238
        %v261 = vpop.f32.mrf.mxu0
        %v262 = vadd.f32 0.0, %v261
        %263 = vdwg.mxu0
        %v264 = vld [vmem:[%s233] sm:$0xf]
        %266 = vset.pattern.permute.xlu0 0
        %267 = vperm.xlu0 %266, %v264
        %v268 = vpop.permute.xlu0 %267
        %v270 = vadd.f32 %v262, %v268
        %v271 = vmax.f32 %v270, 0.0
        %v272 = vrot.slane %v268, 4
        %v274 = vadd.f32 %v262, %v272
        %v275 = vmax.f32 %v274, 0.0
        %v276 = vperm.slane %v271, 0
        %v277 = vlaneseq
        %v278 = vshrl.u32 %v277, 7
        %280 = vset.pattern.permute.xlu0 %v278
        %281 = vperm.xlu0 %280, %v276
        %v282 = vpop.permute.xlu0 %281
        %v283 = vlaneseq
        %v284 = vshrl.u32 %v283, 7
        %v285 = vadd.s32 %v284, 8
        %286 = vset.pattern.permute.xlu0 %v285
        %287 = vperm.xlu0 %286, %v276
        %v288 = vpop.permute.xlu0 %287
        %v289 = vperm.slane %v271, 1
        %v290 = vlaneseq
        %v291 = vshrl.u32 %v290, 7
        %293 = vset.pattern.permute.xlu0 %v291
        %294 = vperm.xlu0 %293, %v289
        %v295 = vpop.permute.xlu0 %294
        %v296 = vlaneseq
        %v297 = vshrl.u32 %v296, 7
        %v298 = vadd.s32 %v297, 8
        %299 = vset.pattern.permute.xlu0 %v298
        %300 = vperm.xlu0 %299, %v289
        %v301 = vpop.permute.xlu0 %300
        %v302 = vperm.slane %v271, 2
        %v303 = vlaneseq
        %v304 = vshrl.u32 %v303, 7
        %306 = vset.pattern.permute.xlu0 %v304
        %307 = vperm.xlu0 %306, %v302
        %v308 = vpop.permute.xlu0 %307
        %v309 = vlaneseq
        %v310 = vshrl.u32 %v309, 7
        %v311 = vadd.s32 %v310, 8
        %312 = vset.pattern.permute.xlu0 %v311
        %313 = vperm.xlu0 %312, %v302
        %v314 = vpop.permute.xlu0 %313
        %v315 = vperm.slane %v271, 3
        %v316 = vlaneseq
        %v317 = vshrl.u32 %v316, 7
        %319 = vset.pattern.permute.xlu0 %v317
        %320 = vperm.xlu0 %319, %v315
        %v321 = vpop.permute.xlu0 %320
        %v322 = vlaneseq
        %v323 = vshrl.u32 %v322, 7
        %v324 = vadd.s32 %v323, 8
        %325 = vset.pattern.permute.xlu0 %v324
        %326 = vperm.xlu0 %325, %v315
        %v327 = vpop.permute.xlu0 %326
        %v328 = vperm.slane %v275, 4
        %v329 = vlaneseq
        %v330 = vshrl.u32 %v329, 7
        %332 = vset.pattern.permute.xlu0 %v330
        %333 = vperm.xlu0 %332, %v328
        %v334 = vpop.permute.xlu0 %333
        %v335 = vlaneseq
        %v336 = vshrl.u32 %v335, 7
        %v337 = vadd.s32 %v336, 8
        %338 = vset.pattern.permute.xlu0 %v337
        %339 = vperm.xlu0 %338, %v328
        %v340 = vpop.permute.xlu0 %339
        %v341 = vperm.slane %v275, 5
        %v342 = vlaneseq
        %v343 = vshrl.u32 %v342, 7
        %345 = vset.pattern.permute.xlu0 %v343
        %346 = vperm.xlu0 %345, %v341
        %v347 = vpop.permute.xlu0 %346
        %v348 = vlaneseq
        %v349 = vshrl.u32 %v348, 7
        %v350 = vadd.s32 %v349, 8
        %351 = vset.pattern.permute.xlu0 %v350
        %352 = vperm.xlu0 %351, %v341
        %v353 = vpop.permute.xlu0 %352
        %v354 = vperm.slane %v275, 6
        %v355 = vlaneseq
        %v356 = vshrl.u32 %v355, 7
        %358 = vset.pattern.permute.xlu0 %v356
        %359 = vperm.xlu0 %358, %v354
        %v360 = vpop.permute.xlu0 %359
        %v361 = vlaneseq
        %v362 = vshrl.u32 %v361, 7
        %v363 = vadd.s32 %v362, 8
        %364 = vset.pattern.permute.xlu0 %v363
        %365 = vperm.xlu0 %364, %v354
        %v366 = vpop.permute.xlu0 %365
        %v367 = vperm.slane %v275, 7
        %v368 = vlaneseq
        %v369 = vshrl.u32 %v368, 7
        %371 = vset.pattern.permute.xlu0 %v369
        %372 = vperm.xlu0 %371, %v367
        %v373 = vpop.permute.xlu0 %372
        %v374 = vlaneseq
        %v375 = vshrl.u32 %v374, 7
        %v376 = vadd.s32 %v375, 8
        %377 = vset.pattern.permute.xlu0 %v376
        %378 = vperm.xlu0 %377, %v367
        %v379 = vpop.permute.xlu0 %378
        %vm380 = vcmask 7168
        %v381 = vsel %vm380, %v282, %v334
        %v382 = vsel %vm380, %v288, %v340
        %v383 = vsel %vm380, %v295, %v347
        %v384 = vsel %vm380, %v301, %v353
        %v385 = vsel %vm380, %v308, %v360
        %v386 = vsel %vm380, %v314, %v366
        %v387 = vsel %vm380, %v321, %v373
        %v388 = vsel %vm380, %v327, %v379
        %v389 = vrot.slane %v385, 4
        %vm390 = vcmask 1047556
        %v391 = vsel %vm390, %v389, %v381
        %v392 = vrot.slane %v381, 4
        %v393 = vsel %vm390, %v385, %v392
        %v395 = vunpack.c.l.s4 1983009808
        %v396 = vunpack.c.0.s8 %v395
        %v397 = vperm.slane %v391, %v396
        %v399 = vunpack.c.l.s4 1983009808
        %v400 = vunpack.c.0.s8 %v399
        %v401 = vperm.slane %v393, %v400
        %v402 = vrot.slane %v387, 4
        %v403 = vsel %vm390, %v402, %v383
        %v404 = vrot.slane %v383, 4
        %v405 = vsel %vm390, %v387, %v404
        %v407 = vunpack.c.l.s4 1983009808
        %v408 = vunpack.c.0.s8 %v407
        %v409 = vperm.slane %v403, %v408
        %v411 = vunpack.c.l.s4 1983009808
        %v412 = vunpack.c.0.s8 %v411
        %v413 = vperm.slane %v405, %v412
        %v414 = vrot.slane %v409, 4
        %v415 = vsel %vm390, %v414, %v397
        %v416 = vrot.slane %v397, 4
        %v417 = vsel %vm390, %v409, %v416
        %v419 = vunpack.c.l.s4 1934713408
        %v420 = vunpack.c.0.s8 %v419
        %v421 = vperm.slane %v415, %v420
        %v423 = vunpack.c.l.s4 1934713408
        %v424 = vunpack.c.0.s8 %v423
        %v425 = vperm.slane %v417, %v424
        %v426 = vrot.slane %v413, 4
        %v427 = vsel %vm390, %v426, %v401
        %v428 = vrot.slane %v401, 4
        %v429 = vsel %vm390, %v413, %v428
        %v431 = vunpack.c.l.s4 1934713408
        %v432 = vunpack.c.0.s8 %v431
        %v433 = vperm.slane %v427, %v432
        %v435 = vunpack.c.l.s4 1934713408
        %v436 = vunpack.c.0.s8 %v435
        %v437 = vperm.slane %v429, %v436
        %v438 = vrot.slane %v421, 4
        %v439 = vsel %vm390, 0.0, %v438
        %v440 = vrot.slane %v425, 4
        %v441 = vsel %vm390, 0.0, %v440
        %v442 = vrot.slane %v433, 4
        %v443 = vsel %vm390, 0.0, %v442
        %v444 = vrot.slane %v437, 4
        %v445 = vsel %vm390, 0.0, %v444
        %v446 = vrot.slane %v386, 4
        %v447 = vsel %vm390, %v446, %v382
        %v448 = vrot.slane %v382, 4
        %v449 = vsel %vm390, %v386, %v448
        %v451 = vunpack.c.l.s4 1983009808
        %v452 = vunpack.c.0.s8 %v451
        %v453 = vperm.slane %v447, %v452
        %v455 = vunpack.c.l.s4 1983009808
        %v456 = vunpack.c.0.s8 %v455
        %v457 = vperm.slane %v449, %v456
        %v458 = vrot.slane %v388, 4
        %v459 = vsel %vm390, %v458, %v384
        %v460 = vrot.slane %v384, 4
        %v461 = vsel %vm390, %v388, %v460
        %v463 = vunpack.c.l.s4 1983009808
        %v464 = vunpack.c.0.s8 %v463
        %v465 = vperm.slane %v459, %v464
        %v467 = vunpack.c.l.s4 1983009808
        %v468 = vunpack.c.0.s8 %v467
        %v469 = vperm.slane %v461, %v468
        %v470 = vrot.slane %v465, 4
        %v471 = vsel %vm390, %v470, %v453
        %v472 = vrot.slane %v453, 4
        %v473 = vsel %vm390, %v465, %v472
        %v475 = vunpack.c.l.s4 1934713408
        %v476 = vunpack.c.0.s8 %v475
        %v477 = vperm.slane %v471, %v476
        %v479 = vunpack.c.l.s4 1934713408
        %v480 = vunpack.c.0.s8 %v479
        %v481 = vperm.slane %v473, %v480
        %v482 = vrot.slane %v469, 4
        %v483 = vsel %vm390, %v482, %v457
        %v484 = vrot.slane %v457, 4
        %v485 = vsel %vm390, %v469, %v484
        %v487 = vunpack.c.l.s4 1934713408
        %v488 = vunpack.c.0.s8 %v487
        %v489 = vperm.slane %v483, %v488
        %v491 = vunpack.c.l.s4 1934713408
        %v492 = vunpack.c.0.s8 %v491
        %v493 = vperm.slane %v485, %v492
        %v494 = vrot.slane %v477, 4
        %v495 = vsel %vm390, 0.0, %v494
        %v496 = vrot.slane %v481, 4
        %v497 = vsel %vm390, 0.0, %v496
        %v498 = vrot.slane %v489, 4
        %v499 = vsel %vm390, 0.0, %v498
        %v500 = vrot.slane %v493, 4
        %v501 = vsel %vm390, 0.0, %v500
        %503 = vrot.lane.b32.xlu0 %v439, 2
        %v504 = vpop.permute.xlu0 %503
        %507 = vrot.lane.b32.xlu0 %v425, 4
        %v508 = vpop.permute.xlu0 %507
        %511 = vrot.lane.b32.xlu0 %v441, 6
        %v512 = vpop.permute.xlu0 %511
        %515 = vrot.lane.b32.xlu0 %v433, 8
        %v516 = vpop.permute.xlu0 %515
        %519 = vrot.lane.b32.xlu0 %v443, 10
        %v520 = vpop.permute.xlu0 %519
        %523 = vrot.lane.b32.xlu0 %v437, 12
        %v524 = vpop.permute.xlu0 %523
        %527 = vrot.lane.b32.xlu0 %v445, 14
        %v528 = vpop.permute.xlu0 %527
        %531 = vrot.lane.b32.xlu0 %v477, 16
        %v532 = vpop.permute.xlu0 %531
        %535 = vrot.lane.b32.xlu0 %v495, 18
        %v536 = vpop.permute.xlu0 %535
        %539 = vrot.lane.b32.xlu0 %v481, 20
        %v540 = vpop.permute.xlu0 %539
        %543 = vrot.lane.b32.xlu0 %v497, 22
        %v544 = vpop.permute.xlu0 %543
        %547 = vrot.lane.b32.xlu0 %v489, 24
        %v548 = vpop.permute.xlu0 %547
        %551 = vrot.lane.b32.xlu0 %v499, 26
        %v552 = vpop.permute.xlu0 %551
        %555 = vrot.lane.b32.xlu0 %v493, 28
        %v556 = vpop.permute.xlu0 %555
        %559 = vrot.lane.b32.xlu0 %v501, 30
        %v560 = vpop.permute.xlu0 %559
        %vm562 = vcmask 15360
        %v563 = vsel %vm562, %v421, %v504
        %v564 = vsel %vm236, %v563, %v508
        %vm565 = vcmask 48128
        %v566 = vsel %vm565, %v564, %v512
        %vm567 = vcmask 64512
        %v568 = vsel %vm567, %v566, %v516
        %vm569 = vcmask 80896
        %v570 = vsel %vm569, %v568, %v520
        %vm571 = vcmask 97280
        %v572 = vsel %vm571, %v570, %v524
        %vm573 = vcmask 113664
        %v574 = vsel %vm573, %v572, %v528
        %vm575 = vcmask 130048
        %v576 = vsel %vm575, %v574, %v532
        %vm577 = vcmask 146432
        %v578 = vsel %vm577, %v576, %v536
        %vm579 = vcmask 162816
        %v580 = vsel %vm579, %v578, %v540
        %vm581 = vcmask 179200
        %v582 = vsel %vm581, %v580, %v544
        %vm583 = vcmask 195584
        %v584 = vsel %vm583, %v582, %v548
        %vm585 = vcmask 211968
        %v586 = vsel %vm585, %v584, %v552
        %vm587 = vcmask 228352
        %v588 = vsel %vm587, %v586, %v556
        %vm589 = vcmask 244736
        %v590 = vsel %vm589, %v588, %v560
        %vm591 = vcmask 257024
        %592 = vst.msk [vmem:[%s218] sm:$0xf] %vm591, %v590
        %s593 = sand.u32 %s128, 1
        %s594 = scalar_lea.sflag [#allocation3], %s593
        %s595 = sand.u32 %s128, 1
        %s596 = smul.addr %s595, 4
        %s597 = scalar_lea.vmem [#allocation2], %s596
        // Predicated region
        $region33: #{tpu_custom_call.1} parent=31 // pred_check
          %p598 = pneg %p138
        $region34: #{tpu_custom_call.1} parent=31 // pred_check_branch
          %600 = sbr.rel (%p598) target = $region36
        $region35: #{tpu_custom_call.1} parent=31 // pred_region
          %602 = vsyncadd %s594, 0
          %s603 = sadd.s32 %s23, %s24
          %s604 = sadd.s32 %s603, %s22
          %s605 = smul.addr %s604, 4
          %s606 = scalar_lea.hbm %s3, %s605
          %s608 = sshll.u32 %s597, 4
          %s609 = int_to_ptr.vmem [resolvable:$true] %s608
          %s610 = sshll.u32 %s606, 4
          %s611 = int_to_ptr.hbm [resolvable:$true] %s610
          %613 = dma.vmem_to_hbm [thread:$0]  %s609, 64, %s611, %s594
        $region36: #{tpu_custom_call.1} parent=31 // pred_fallthru
          _
      $region32: #{tpu_custom_call.1} parent=5 // pred_fallthru
        _
      %p614 = scmp.le.s32.totalorder 2, %s12
      // Predicated region
      $region37: #{tpu_custom_call.1} parent=5 // pred_check
        %p615 = pneg %p614
      $region38: #{tpu_custom_call.1} parent=5 // pred_check_branch
        %617 = sbr.rel (%p615) target = $region40
      $region39: #{tpu_custom_call.1} parent=5 // pred_region
        %s618 = ssub.s32 %s12, 2
        // Predicated region
        $region41: #{tpu_custom_call.1} parent=39 // pred_check
          %p619 = pneg %p144
        $region42: #{tpu_custom_call.1} parent=39 // pred_check_branch
          %621 = sbr.rel (%p619) target = $region44
        $region43: #{tpu_custom_call.1} parent=39 // pred_region
          %s622 = sand.u32 %s129, 1
          %s623 = scalar_lea.sflag [#allocation3], %s622
          %s624 = sand.u32 %s129, 1
          %s625 = smul.addr %s624, 4
          %s626 = scalar_lea.vmem [#allocation2], %s625
          %628 = dma.done %s623, 64
        $region44: #{tpu_custom_call.1} parent=39 // pred_fallthru
          _
      $region40: #{tpu_custom_call.1} parent=5 // pred_fallthru
        _
    $region6: #{tpu_custom_call.1} parent=1 // loop_footer
      %s16 = sadd.s32 1, %s12
    $region7: #{tpu_custom_call.1} parent=1 // loop_footer_branch
      %11 = sbr.rel target = $region3
    $region8: #{tpu_custom_call.1} parent=1 // loop_exit
      _
    %629 = vsyncpa [#allocation3], 1
    %s630 = scalar_lea.sflag [#allocation3], 1
    %631 = vsyncpa %s630, 1

// kernel: tpu_custom_call.1
$region0: #{tpu_custom_call.1}
  #allocation0 [shape = 'u32[]', space=smem, size = 0x4, offset = 0x4, fixed_abs, tag = 'smem constant byte address 0x4 - core index']
  #allocation1 [shape = 'u32[72,128]{1,0:T(1,128)}', space=vmem, size = 0x9000, scoped, tag = 'internal scratch']
  %s0 = inlined_call_operand.vmem [shape: f32[2,4,16], index: 0, kind: input, shape index: {}]
  %s1 = inlined_call_operand.vmem [shape: f32[1,8,4], index: 1, kind: input, shape index: {}]
  %s2 = inlined_call_operand.vmem [shape: f32[4,1], index: 2, kind: input, shape index: {}]
  %s3 = inlined_call_operand.hbm [shape: f32[2,4,16], index: 3, kind: output, shape index: {0}]
  %s4 = inlined_call_operand.hbm [shape: f32[2,4,16], index: 4, kind: output, shape index: {1}]
  %5 = xla_tuple %s3, %s4
  %s6 = sld [smem:[#allocation0]]
  $region53: #{tpu_custom_call.1} parent=0
    _
  %s8 = ssub.s32 1, %s6
  %s9 = scalar_select 0, %s8, %s6
  $region1: #{tpu_custom_call.1} parent=0
    #allocation2 [shape = 'u8[4096]{0}', space=vmem, size = 0x1000, scoped, tag = 'output window, operand 0']
    #allocation3 [shape = 's32[2]{0}', space=sflag, size = 0x8, scoped, tag = 'scoped memory for tpu_custom_call.1']
    #allocation4 [shape = 'u8[4096]{0}', space=vmem, size = 0x1000, scoped, tag = 'output window, operand 1']
    #allocation5 [shape = 's32[2]{0}', space=sflag, size = 0x8, scoped, tag = 'scoped memory for tpu_custom_call.1']
    %10 = vsyncpa [#allocation3], 0
    %s11 = scalar_lea.sflag [#allocation3], 1
    %12 = vsyncpa %s11, 0
    %13 = vsyncpa [#allocation5], 0
    %s14 = scalar_lea.sflag [#allocation5], 1
    %15 = vsyncpa %s14, 0
    loop: start=0, step=1, limit=4
    $region2: #{tpu_custom_call.1} parent=1 // loop_pre_header
      _
    $region3: #{tpu_custom_call.1} parent=1 // loop_header
      %s17 = sphi 0, %s21
      %p18 = scmp.ge.s32.totalorder %s17, 4
      %s24 = sphi 0, %s43
      %s25 = sphi 0, %s39
      %s26 = sphi 0, %s35
      %s27 = sphi 0, %s24
      %s28 = sphi 0, %s25
      %s29 = sphi 0, %s26
      %s30 = sphi 0, %s27
      %s31 = sphi 0, %s28
      %s32 = sphi 0, %s29
      %s48 = sphi 0, %s50
      %s51 = sphi 0, %s48
      %s52 = sphi 0, %s51
      %s68 = sphi 0, %s52
      %s74 = sphi 0, %s76
      %s77 = sphi 0, %s74
      %s78 = sphi 0, %s77
      %s94 = sphi 0, %s78
      %s100 = sphi 0, %s102
      %s103 = sphi 0, %s100
      %s104 = sphi 0, %s103
      %s120 = sphi 0, %s104
      %s130 = sphi 0, %s132
      %s133 = sphi 0, %s130
      %s134 = sphi 0, %s133
      %s150 = sphi 0, %s134
      %s160 = sphi 0, %s162
      %s163 = sphi 0, %s160
      %s164 = sphi 0, %s163
      %s180 = sphi 0, %s164
    $region4: #{tpu_custom_call.1} parent=1 // loop_header_branch
      %20 = sbr.rel (%p18) target = $region8
    $region5: #{tpu_custom_call.1} parent=1 // loop_body
      %s22 = ssub.s32 %s17, 1
      %s23 = ssub.s32 %s17, 2
      %s33 = sadd.s32 1, %s26
      %p34 = scmp.ge.s32.totalorder %s33, 1
      %s35 = scalar_select %p34, 0, %s33
      %s36 = sadd.s32 1, %s25
      %s37 = scalar_select %p34, %s36, %s25
      %p38 = scmp.ge.s32.totalorder %s37, 1
      %s39 = scalar_select %p38, 0, %s37
      %s40 = sadd.s32 1, %s24
      %s41 = scalar_select %p38, %s40, %s24
      %p42 = scmp.ge.s32.totalorder %s41, 2
      %s43 = scalar_select %p42, 0, %s41
      %s44 = ssub.s32 %s24, %s43
      %s45 = ssub.s32 %s25, %s39
      %s46 = sor.u32 %s44, %s45
      %p47 = scmp.eq.s32.totalorder %s46, 0
      %s49 = sadd.s32 %s48, 1
      %s50 = scalar_select %p47, %s48, %s49
      %p53 = pneg %p47
      %p54 = scmp.eq.s32.totalorder %s17, 1
      %p55 = por %p53, %p54
      %p56 = scmp.ne.s32.totalorder %s48, %s51
      %p57 = scmp.eq.s32.totalorder %s17, 0
      %p58 = por %p56, %p57
      %p59 = scmp.ne.s32.totalorder %s48, %s51
      %p60 = scmp.eq.s32.totalorder %s22, 1
      %p61 = por %p59, %p60
      %p62 = scmp.ne.s32.totalorder %s51, %s52
      %p63 = scmp.eq.s32.totalorder %s22, 0
      %p64 = por %p62, %p63
      %p65 = scmp.ne.s32.totalorder %s51, %s52
      %p66 = scmp.eq.s32.totalorder %s23, 1
      %p67 = por %p65, %p66
      %p69 = scmp.ne.s32.totalorder %s52, %s68
      %p70 = scmp.eq.s32.totalorder %s23, 0
      %p71 = por %p69, %p70
      %s72 = ssub.s32 %s26, %s35
      %p73 = scmp.eq.s32.totalorder %s72, 0
      %s75 = sadd.s32 %s74, 1
      %s76 = scalar_select %p73, %s74, %s75
      %p79 = pneg %p73
      %p80 = scmp.eq.s32.totalorder %s17, 1
      %p81 = por %p79, %p80
      %p82 = scmp.ne.s32.totalorder %s74, %s77
      %p83 = scmp.eq.s32.totalorder %s17, 0
      %p84 = por %p82, %p83
      %p85 = scmp.ne.s32.totalorder %s74, %s77
      %p86 = scmp.eq.s32.totalorder %s22, 1
      %p87 = por %p85, %p86
      %p88 = scmp.ne.s32.totalorder %s77, %s78
      %p89 = scmp.eq.s32.totalorder %s22, 0
      %p90 = por %p88, %p89
      %p91 = scmp.ne.s32.totalorder %s77, %s78
      %p92 = scmp.eq.s32.totalorder %s23, 1
      %p93 = por %p91, %p92
      %p95 = scmp.ne.s32.totalorder %s78, %s94
      %p96 = scmp.eq.s32.totalorder %s23, 0
      %p97 = por %p95, %p96
      %s98 = ssub.s32 %s26, %s35
      %p99 = scmp.eq.s32.totalorder %s98, 0
      %s101 = sadd.s32 %s100, 1
      %s102 = scalar_select %p99, %s100, %s101
      %p105 = pneg %p99
      %p106 = scmp.eq.s32.totalorder %s17, 1
      %p107 = por %p105, %p106
      %p108 = scmp.ne.s32.totalorder %s100, %s103
      %p109 = scmp.eq.s32.totalorder %s17, 0
      %p110 = por %p108, %p109
      %p111 = scmp.ne.s32.totalorder %s100, %s103
      %p112 = scmp.eq.s32.totalorder %s22, 1
      %p113 = por %p111, %p112
      %p114 = scmp.ne.s32.totalorder %s103, %s104
      %p115 = scmp.eq.s32.totalorder %s22, 0
      %p116 = por %p114, %p115
      %p117 = scmp.ne.s32.totalorder %s103, %s104
      %p118 = scmp.eq.s32.totalorder %s23, 1
      %p119 = por %p117, %p118
      %p121 = scmp.ne.s32.totalorder %s104, %s120
      %p122 = scmp.eq.s32.totalorder %s23, 0
      %p123 = por %p121, %p122
      %s124 = ssub.s32 %s24, %s43
      %s125 = ssub.s32 %s26, %s35
      %s126 = sor.u32 %s124, %s125
      %s127 = ssub.s32 %s25, %s39
      %s128 = sor.u32 %s126, %s127
      %p129 = scmp.eq.s32.totalorder %s128, 0
      %s131 = sadd.s32 %s130, 1
      %s132 = scalar_select %p129, %s130, %s131
      %p135 = pneg %p129
      %p136 = scmp.eq.s32.totalorder %s17, 1
      %p137 = por %p135, %p136
      %p138 = scmp.ne.s32.totalorder %s130, %s133
      %p139 = scmp.eq.s32.totalorder %s17, 0
      %p140 = por %p138, %p139
      %p141 = scmp.ne.s32.totalorder %s130, %s133
      %p142 = scmp.eq.s32.totalorder %s22, 1
      %p143 = por %p141, %p142
      %p144 = scmp.ne.s32.totalorder %s133, %s134
      %p145 = scmp.eq.s32.totalorder %s22, 0
      %p146 = por %p144, %p145
      %p147 = scmp.ne.s32.totalorder %s133, %s134
      %p148 = scmp.eq.s32.totalorder %s23, 1
      %p149 = por %p147, %p148
      %p151 = scmp.ne.s32.totalorder %s134, %s150
      %p152 = scmp.eq.s32.totalorder %s23, 0
      %p153 = por %p151, %p152
      %s154 = ssub.s32 %s24, %s43
      %s155 = ssub.s32 %s26, %s35
      %s156 = sor.u32 %s154, %s155
      %s157 = ssub.s32 %s25, %s39
      %s158 = sor.u32 %s156, %s157
      %p159 = scmp.eq.s32.totalorder %s158, 0
      %s161 = sadd.s32 %s160, 1
      %s162 = scalar_select %p159, %s160, %s161
      %p165 = pneg %p159
      %p166 = scmp.eq.s32.totalorder %s17, 1
      %p167 = por %p165, %p166
      %p168 = scmp.ne.s32.totalorder %s160, %s163
      %p169 = scmp.eq.s32.totalorder %s17, 0
      %p170 = por %p168, %p169
      %p171 = scmp.ne.s32.totalorder %s160, %s163
      %p172 = scmp.eq.s32.totalorder %s22, 1
      %p173 = por %p171, %p172
      %p174 = scmp.ne.s32.totalorder %s163, %s164
      %p175 = scmp.eq.s32.totalorder %s22, 0
      %p176 = por %p174, %p175
      %p177 = scmp.ne.s32.totalorder %s163, %s164
      %p178 = scmp.eq.s32.totalorder %s23, 1
      %p179 = por %p177, %p178
      %p181 = scmp.ne.s32.totalorder %s164, %s180
      %p182 = scmp.eq.s32.totalorder %s23, 0
      %p183 = por %p181, %p182
      %p184 = scmp.le.s32.totalorder 1, %s17
      %p185 = scmp.lt.s32.totalorder %s17, 3
      %p186 = pnand %p184, %p185
      %p187 = pneg %p186
      // Predicated region
      $region9: #{tpu_custom_call.1} parent=5 // pred_check
        _
      $region10: #{tpu_custom_call.1} parent=5 // pred_check_branch
        %189 = sbr.rel (%p186) target = $region12
      $region11: #{tpu_custom_call.1} parent=5 // pred_region
        %s190 = ssub.s32 %s17, 1
        // Predicated region
        $region13: #{tpu_custom_call.1} parent=11 // pred_check
          %p191 = pneg %p90
        $region14: #{tpu_custom_call.1} parent=11 // pred_check_branch
          %193 = sbr.rel (%p191) target = $region16
        $region15: #{tpu_custom_call.1} parent=11 // pred_region
          %p194 = scmp.lt.s32.totalorder %s29, 0
          %s195 = scalar_select %p194, %s29, 0
          %s196 = smul.addr %s195, 8
          %s197 = scalar_lea.vmem %s1, %s196
        $region16: #{tpu_custom_call.1} parent=11 // pred_fallthru
          _
        // Predicated region
        $region17: #{tpu_custom_call.1} parent=11 // pred_check
          %p198 = pneg %p116
        $region18: #{tpu_custom_call.1} parent=11 // pred_check_branch
          %200 = sbr.rel (%p198) target = $region20
        $region19: #{tpu_custom_call.1} parent=11 // pred_region
          %p201 = scmp.lt.s32.totalorder %s29, 0
          %s202 = scalar_select %p201, %s29, 0
          %s203 = smul.addr %s202, 4
          %s204 = scalar_lea.vmem %s2, %s203
        $region20: #{tpu_custom_call.1} parent=11 // pred_fallthru
          _
      $region12: #{tpu_custom_call.1} parent=5 // pred_fallthru
        _
      %p205 = scmp.lt.s32.totalorder %s17, 2
      // Predicated region
      $region21: #{tpu_custom_call.1} parent=5 // pred_check
        %p206 = pneg %p205
      $region22: #{tpu_custom_call.1} parent=5 // pred_check_branch
        %208 = sbr.rel (%p206) target = $region24
      $region23: #{tpu_custom_call.1} parent=5 // pred_region
        // Predicated region
        $region25: #{tpu_custom_call.1} parent=23 // pred_check
          %p209 = pneg %p58
        $region26: #{tpu_custom_call.1} parent=23 // pred_check_branch
          %211 = sbr.rel (%p209) target = $region28
        $region27: #{tpu_custom_call.1} parent=23 // pred_region
          %p212 = scmp.lt.s32.totalorder %s24, 1
          %s213 = scalar_select %p212, %s24, 1
          %p214 = scmp.lt.s32.totalorder %s25, 0
          %s215 = scalar_select %p214, %s25, 0
          %s216 = sadd.s32 %s215, %s213
          %s217 = smul.addr %s216, 4
          %s218 = scalar_lea.vmem %s0, %s217
        $region28: #{tpu_custom_call.1} parent=23 // pred_fallthru
          _
      $region24: #{tpu_custom_call.1} parent=5 // pred_fallthru
        _
      %p219 = scmp.le.s32.totalorder 1, %s17
      %p220 = scmp.lt.s32.totalorder %s17, 3
      %p221 = pnand %p219, %p220
      %p222 = pneg %p221
      // Predicated region
      $region29: #{tpu_custom_call.1} parent=5 // pred_check
        _
      $region30: #{tpu_custom_call.1} parent=5 // pred_check_branch
        %224 = sbr.rel (%p221) target = $region32
      $region31: #{tpu_custom_call.1} parent=5 // pred_region
        %s225 = ssub.s32 %s17, 1
        %p226 = scmp.lt.s32.totalorder %s27, 1
        %s227 = scalar_select %p226, %s27, 1
        %p228 = scmp.lt.s32.totalorder %s28, 0
        %s229 = scalar_select %p228, %s28, 0
        %s230 = sadd.s32 %s229, %s227
        %s231 = smul.addr %s230, 4
        %s232 = scalar_lea.vmem %s0, %s231
        %p233 = pneg %p64
        %p234 = pneg %p61
        %p235 = scmp.lt.s32.totalorder %s29, 0
        %s236 = scalar_select %p235, %s29, 0
        %s237 = smul.addr %s236, 8
        %s238 = scalar_lea.vmem %s1, %s237
        %p239 = pneg %p90
        %p240 = pneg %p87
        %p241 = scmp.lt.s32.totalorder %s29, 0
        %s242 = scalar_select %p241, %s29, 0
        %s243 = smul.addr %s242, 4
        %s244 = scalar_lea.vmem %s2, %s243
        %p245 = pneg %p116
        %p246 = pneg %p113
        %p247 = pneg %p146
        %p248 = pneg %p143
        %s249 = sand.u32 %s133, 1
        %s250 = scalar_lea.sflag [#allocation3], %s249
        %s251 = sand.u32 %s133, 1
        %s252 = smul.addr %s251, 4
        %s253 = scalar_lea.vmem [#allocation2], %s252
        %p254 = pneg %p176
        %p255 = pneg %p173
        %s256 = sand.u32 %s163, 1
        %s257 = scalar_lea.sflag [#allocation5], %s256
        %s258 = sand.u32 %s163, 1
        %s259 = smul.addr %s258, 4
        %s260 = scalar_lea.vmem [#allocation4], %s259
        %p261 = scmp.lt.s32.totalorder %s27, 1
        %s262 = scalar_select %p261, %s27, 1
        %p263 = scmp.lt.s32.totalorder %s28, 0
        %s264 = scalar_select %p263, %s28, 0
        %s265 = sadd.s32 %s264, %s262
        %s266 = smul.addr %s265, 4
        %s267 = scalar_lea.vmem %s0, %s266
        %p268 = scmp.lt.s32.totalorder %s29, 0
        %s269 = scalar_select %p268, %s29, 0
        %s270 = smul.addr %s269, 8
        %s271 = scalar_lea.vmem %s1, %s270
        %p272 = scmp.lt.s32.totalorder %s29, 0
        %s273 = scalar_select %p272, %s29, 0
        %s274 = smul.addr %s273, 4
        %s275 = scalar_lea.vmem %s2, %s274
        %v276 = vld [vmem:[%s271] sm:$0xff]
        %v277 = vld [vmem:[%s267] sm:$0xf]
        %vm278 = vcmask 31744
        %v280 = vsel %vm278, %v276, 0
        %vm282 = vcmask 1043456
        %v284 = vsel %vm282, %v277, 0
        %286 = vmatpush.msra.mxu0 0.0
        %287 = vmatpush.msra.mxu0 0.0
        %288 = vmatpush.msra.mxu0 0.0
        %289 = vmatpush.msra.mxu0 0.0
        %290 = vmatpush.msra.mxu0 0.0
        %291 = vmatpush.msra.mxu0 0.0
        %292 = vmatpush.msra.mxu0 0.0
        %293 = vmatpush.msra.mxu0 0.0
        %294 = vmatpush.msra.mxu0 0.0
        %295 = vmatpush.msra.mxu0 0.0
        %296 = vmatpush.msra.mxu0 0.0
        %297 = vmatpush.msra.mxu0 0.0
        %298 = vmatpush.msra.mxu0 0.0
        %299 = vmatpush.msra.mxu0 0.0
        %300 = vmatpush.msra.mxu0 0.0
        %301 = vmatpush.msra.mxu0 %v284
        %302 = vmatmul.f32.gmra.mxu0 %v280
        %v303 = vpop.f32.mrf.mxu0
        %v304 = vadd.f32 0.0, %v303
        %305 = vdwg.mxu0
        %v306 = vld [vmem:[%s275] sm:$0xf]
        %308 = vset.pattern.permute.xlu0 0
        %309 = vperm.xlu0 %308, %v306
        %v310 = vpop.permute.xlu0 %309
        %v312 = vadd.f32 %v304, %v310
        %v313 = vmax.f32 %v312, 0.0
        %vm314 = vcmask 125952
        %315 = vst.msk [vmem:[%s253] sm:$0xf] %vm314, %v313
        %v316 = vrot.slane %v310, 4
        %v318 = vadd.f32 %v304, %v316
        %v319 = vmax.f32 %v318, 0.0
        %vm320 = vcmask 130052
        %321 = vst.msk [vmem:[%s260 - $0x4] sm:$0xf0] %vm320, %v319
        %s322 = sand.u32 %s133, 1
        %s323 = scalar_lea.sflag [#allocation3], %s322
        %s324 = sand.u32 %s133, 1
        %s325 = smul.addr %s324, 4
        %s326 = scalar_lea.vmem [#allocation2], %s325
        %s327 = sand.u32 %s163, 1
        %s328 = scalar_lea.sflag [#allocation5], %s327
        %s329 = sand.u32 %s163, 1
        %s330 = smul.addr %s329, 4
        %s331 = scalar_lea.vmem [#allocation4], %s330
        // Predicated region
        $region33: #{tpu_custom_call.1} parent=31 // pred_check
          %p332 = pneg %p143
        $region34: #{tpu_custom_call.1} parent=31 // pred_check_branch
          %334 = sbr.rel (%p332) target = $region36
        $region35: #{tpu_custom_call.1} parent=31 // pred_region
          %336 = vsyncadd %s323, 0
          %s337 = sadd.s32 %s28, %s29
          %s338 = sadd.s32 %s337, %s27
          %s339 = smul.addr %s338, 4
          %s340 = scalar_lea.hbm %s3, %s339
          %s342 = sshll.u32 %s326, 4
          %s343 = int_to_ptr.vmem [resolvable:$true] %s342
          %s344 = sshll.u32 %s340, 4
          %s345 = int_to_ptr.hbm [resolvable:$true] %s344
          %347 = dma.vmem_to_hbm [thread:$0]  %s343, 64, %s345, %s323
        $region36: #{tpu_custom_call.1} parent=31 // pred_fallthru
          _
        // Predicated region
        $region37: #{tpu_custom_call.1} parent=31 // pred_check
          %p348 = pneg %p173
        $region38: #{tpu_custom_call.1} parent=31 // pred_check_branch
          %350 = sbr.rel (%p348) target = $region40
        $region39: #{tpu_custom_call.1} parent=31 // pred_region
          %352 = vsyncadd %s328, 0
          %s353 = sadd.s32 %s28, %s29
          %s354 = sadd.s32 %s353, %s27
          %s355 = smul.addr %s354, 4
          %s356 = scalar_lea.hbm %s4, %s355
          %s358 = sshll.u32 %s331, 4
          %s359 = int_to_ptr.vmem [resolvable:$true] %s358
          %s360 = sshll.u32 %s356, 4
          %s361 = int_to_ptr.hbm [resolvable:$true] %s360
          %363 = dma.vmem_to_hbm [thread:$0]  %s359, 64, %s361, %s328
        $region40: #{tpu_custom_call.1} parent=31 // pred_fallthru
          _
      $region32: #{tpu_custom_call.1} parent=5 // pred_fallthru
        _
      %p364 = scmp.le.s32.totalorder 2, %s17
      // Predicated region
      $region41: #{tpu_custom_call.1} parent=5 // pred_check
        %p365 = pneg %p364
      $region42: #{tpu_custom_call.1} parent=5 // pred_check_branch
        %367 = sbr.rel (%p365) target = $region44
      $region43: #{tpu_custom_call.1} parent=5 // pred_region
        %s368 = ssub.s32 %s17, 2
        // Predicated region
        $region45: #{tpu_custom_call.1} parent=43 // pred_check
          %p369 = pneg %p149
        $region46: #{tpu_custom_call.1} parent=43 // pred_check_branch
          %371 = sbr.rel (%p369) target = $region48
        $region47: #{tpu_custom_call.1} parent=43 // pred_region
          %s372 = sand.u32 %s134, 1
          %s373 = scalar_lea.sflag [#allocation3], %s372
          %s374 = sand.u32 %s134, 1
          %s375 = smul.addr %s374, 4
          %s376 = scalar_lea.vmem [#allocation2], %s375
          %378 = dma.done %s373, 64
        $region48: #{tpu_custom_call.1} parent=43 // pred_fallthru
          _
        // Predicated region
        $region49: #{tpu_custom_call.1} parent=43 // pred_check
          %p379 = pneg %p179
        $region50: #{tpu_custom_call.1} parent=43 // pred_check_branch
          %381 = sbr.rel (%p379) target = $region52
        $region51: #{tpu_custom_call.1} parent=43 // pred_region
          %s382 = sand.u32 %s164, 1
          %s383 = scalar_lea.sflag [#allocation5], %s382
          %s384 = sand.u32 %s164, 1
          %s385 = smul.addr %s384, 4
          %s386 = scalar_lea.vmem [#allocation4], %s385
          %388 = dma.done %s383, 64
        $region52: #{tpu_custom_call.1} parent=43 // pred_fallthru
          _
      $region44: #{tpu_custom_call.1} parent=5 // pred_fallthru
        _
    $region6: #{tpu_custom_call.1} parent=1 // loop_footer
      %s21 = sadd.s32 1, %s17
    $region7: #{tpu_custom_call.1} parent=1 // loop_footer_branch
      %16 = sbr.rel target = $region3
    $region8: #{tpu_custom_call.1} parent=1 // loop_exit
      _
    %389 = vsyncpa [#allocation3], 1
    %s390 = scalar_lea.sflag [#allocation3], 1
    %391 = vsyncpa %s390, 1
    %392 = vsyncpa [#allocation5], 1
    %s393 = scalar_lea.sflag [#allocation5], 1
    %394 = vsyncpa %s393, 1

</llo_original>
